<compile_context>
chip_gen: v7x
topology: tpu7x:2x2x1
jax: 0.10.0
libtpu: 0.0.40
codegen_flags: <defaults>
</compile_context>

<pallas_src>
import jax
import jax.numpy as jnp
from jax import lax
from jax.experimental import pallas as pl
from jax.experimental.pallas import tpu as pltpu


def _round_up(x: int, m: int) -> int:
    return ((x + m - 1) // m) * m


# --------------------------------------------------------------------------- #
# Kernel
# --------------------------------------------------------------------------- #
def memory_bank_kernel(feats_ref, bank_ref, scale_ref, out_ref, fnorm_ref):
    """Grid = (batch tiles, class tiles); class axis is innermost & 'arbitrary'.

    feats_ref : (tile_m, k_pad) f32      -- raw features (padded)
    bank_ref  : (k_pad, tile_n) bf16/f32 -- pre-transposed class sums
    scale_ref : (1, tile_n)     f32      -- exact 0.5 / ctr per class
    out_ref   : (tile_m, tile_n) f32
    fnorm_ref : (tile_m, k_pad) scratch  -- normalized (and cast) feats cache
    """
    # --- L2-normalize + cast the feats tile ONCE per batch tile --------------
    # The feats block index depends only on the batch-tile index and the class
    # axis is the innermost (sequential) grid dim, so this body runs exactly
    # once per batch tile; subsequent class tiles reuse the VMEM cache.
    @pl.when(pl.program_id(1) == 0)
    def _():
        f = feats_ref[...].astype(jnp.float32)
        sq = jnp.sum(f * f, axis=1, keepdims=True)
        inv_norm = lax.rsqrt(jnp.maximum(sq, 1e-24))  # == 1 / max(||f||, 1e-12)
        fnorm_ref[...] = (f * inv_norm).astype(fnorm_ref.dtype)

    # --- MXU matmul against the pre-transposed (dim, classes) bank -----------
    sims = jnp.dot(fnorm_ref[...], bank_ref[...],
                   preferred_element_type=jnp.float32)

    # --- (sims/ctr + 1)/2 fused as one mul + add with the exact 0.5/ctr row --
    out_ref[...] = sims * scale_ref[...] + 0.5


# --------------------------------------------------------------------------- #
# Bank packing (run once per memory-bank update, NOT per forward call)
# --------------------------------------------------------------------------- #
def pack_memory_bank(mem_sums, ctrs, *, use_bf16_matmul=True, max_tile_n=512,
                     vmem_budget_bytes=40 * 1024 * 1024, tile_m_hint=256):
    """mem_sums: (num_classes, dim) f32 running sums; ctrs: (num_classes,) counts.

    Returns a dict holding the padded, pre-transposed (dim, classes) bank in the
    matmul dtype plus an exact f32 row of 0.5/ctr.  Keep this packed state
    around between forward calls; only re-pack when the memory changes.
    """
    num_classes, dim = mem_sums.shape
    k_pad = _round_up(dim, 128)
    bank_dtype = jnp.bfloat16 if use_bf16_matmul else jnp.float32
    bank_bytes = jnp.dtype(bank_dtype).itemsize

    # Prefer one lane-dense class tile covering all classes (bank fetched once,
    # never re-streamed across batch tiles) if it fits the VMEM budget.
    n_full = _round_up(num_classes, 128)

    def _usage(tn):
        tm = tile_m_hint
        return (2 * tm * k_pad * 4            # feats input block (f32, dbl-buf)
                + 2 * k_pad * tn * bank_bytes  # bank block (dbl-buf)
                + 2 * tm * tn * 4              # output block (f32, dbl-buf)
                + tm * k_pad * bank_bytes)     # fnorm scratch

    tile_n = n_full
    if _usage(tile_n) > vmem_budget_bytes:
        tile_n = min(n_full, max_tile_n)
        while tile_n > 128 and _usage(tile_n) > vmem_budget_bytes:
            tile_n //= 2
    n_pad = _round_up(num_classes, tile_n)

    bank_t = (jnp.zeros((k_pad, n_pad), jnp.float32)
              .at[:dim, :num_classes].set(mem_sums.astype(jnp.float32).T)
              .astype(bank_dtype))
    # Exact 0.5/ctr (f32).  Padded (discarded) columns get 0 -> score 0.5.
    scale = jnp.zeros((1, n_pad), jnp.float32).at[0, :num_classes].set(
        0.5 / ctrs.astype(jnp.float32))

    return dict(bank_t=bank_t, scale=scale, dim=dim, num_classes=num_classes,
                k_pad=k_pad, n_pad=n_pad, tile_n=tile_n,
                use_bf16_matmul=use_bf16_matmul)


# --------------------------------------------------------------------------- #
# Forward (hot path)
# --------------------------------------------------------------------------- #
def memory_bank_forward(feats, bank, *, tile_m=256):
    """feats: (bs, dim) f32; bank: output of pack_memory_bank.

    Returns (bs, num_classes) f32 scores == ((normalize(feats) @ (sums/ctr).T) + 1) / 2.
    """
    bs, dim = feats.shape
    assert dim == bank["dim"]
    k_pad, n_pad, tile_n = bank["k_pad"], bank["n_pad"], bank["tile_n"]
    compute_dtype = jnp.bfloat16 if bank["use_bf16_matmul"] else jnp.float32

    # Right-size the batch tile (avoid ragged-padding blow-up).
    tile_m = min(tile_m, _round_up(bs, 8))
    m_pad = _round_up(bs, tile_m)

    feats_p = jnp.zeros((m_pad, k_pad), jnp.float32).at[:bs, :dim].set(
        feats.astype(jnp.float32))

    grid = (m_pad // tile_m, n_pad // tile_n)

    out = pl.pallas_call(
        memory_bank_kernel,
        out_shape=jax.ShapeDtypeStruct((m_pad, n_pad), jnp.float32),
        grid_spec=pltpu.PrefetchScalarGridSpec(
            num_scalar_prefetch=0,
            grid=grid,
            in_specs=[
                # feats tile: full (padded) feature axis; block index depends
                # only on the batch tile -> fetched once per batch tile.
                pl.BlockSpec((tile_m, k_pad), lambda i, j: (i, 0)),
                # bank tile: (K, tile_n), classes on the lane axis.
                pl.BlockSpec((k_pad, tile_n), lambda i, j: (0, j)),
                # exact 0.5/ctr row for this class tile.
                pl.BlockSpec((1, tile_n), lambda i, j: (0, j)),
            ],
            out_specs=pl.BlockSpec((tile_m, tile_n), lambda i, j: (i, j)),
            scratch_shapes=[pltpu.VMEM((tile_m, k_pad), compute_dtype)],
        ),
        compiler_params=pltpu.CompilerParams(
            # Batch tiles split across TensorCores (v7x megacore); the class
            # axis must stay sequential ('arbitrary') so the j==0 normalization
            # cached in scratch is valid for every class tile of a batch tile.
            dimension_semantics=("parallel", "arbitrary"),
            vmem_limit_bytes=48 * 1024 * 1024,
        ),
    )(feats_p, bank["bank_t"], bank["scale"])

    return out[:bs, :bank["num_classes"]]


# --------------------------------------------------------------------------- #
# Pure-JAX reference (mirrors the PyTorch forward exactly, f32 throughout)
# --------------------------------------------------------------------------- #
def reference_forward(feats, mem_sums, ctrs):
    norm = jnp.sqrt(jnp.sum(feats * feats, axis=1, keepdims=True))
    f = feats / jnp.maximum(norm, 1e-12)
    mem = mem_sums / ctrs.astype(jnp.float32)[:, None]   # (num_classes, dim)
    sims = f @ mem.T                                       # (bs, num_classes)
    return (sims + 1.0) / 2.0


if __name__ == "__main__":
    num_classes = 4
    dim = 32
    bs = 8

    key = jax.random.PRNGKey(0)
    k_feats, k_mem = jax.random.split(key)

    feats = jax.random.normal(k_feats, (bs, dim), dtype=jnp.float32)

    # Deterministic synthetic memory state: counters > 0 (a fresh bank with
    # ctr == 0 divides by zero in the PyTorch reference too; not exercised).
    ctrs = jnp.arange(1, num_classes + 1, dtype=jnp.int32) * 3           # cls_{i}_ctr
    mem_sums = jax.random.normal(k_mem, (num_classes, dim), dtype=jnp.float32) \
               * ctrs.astype(jnp.float32)[:, None]                       # cls_{i} running sums

    # Pack once (persistent between forwards), then run the hot path.
    bank = pack_memory_bank(mem_sums, ctrs, use_bf16_matmul=True)
    scores = memory_bank_forward(feats, bank)
    scores = jax.block_until_ready(scores)

    ref = reference_forward(feats, mem_sums, ctrs)
    assert scores.shape == (bs, num_classes)
    # bf16 MXU operands (f32 accumulate) give ~1e-2-level absolute deviation on
    # the [0,1] scores versus the exact f32 reference; the ctr divide itself is
    # exact (precomputed 0.5/ctr in f32, no approx reciprocal).
    assert jnp.allclose(scores, ref, atol=2e-2, rtol=2e-2), \
        f"max abs diff {jnp.max(jnp.abs(scores - ref))}"

    print("KERNEL_OK")
</pallas_src>

<mosaic_0001>
module attributes {stable_mosaic.version = 11 : i64} {
  func.func @memory_bank_kernel(%arg0: i32, %arg1: i32, %arg2: memref<8x128xf32, #tpu.memory_space<vmem>>, %arg3: memref<128x128xbf16, #tpu.memory_space<vmem>>, %arg4: memref<1x128xf32, #tpu.memory_space<vmem>>, %arg5: memref<8x128xf32, #tpu.memory_space<vmem>>, %arg6: memref<8x128xbf16, #tpu.memory_space<vmem>>) attributes {dimension_semantics = [#tpu.dimension_semantics<parallel>, #tpu.dimension_semantics<arbitrary>], iteration_bounds = array<i64: 1, 1>, scalar_prefetch = 0 : i64, scratch_operands = 1 : i64, tpu.core_type = #tpu.core_type<tc>, window_params = [{transform_indices = @transform_0, window_bounds = array<i64: 8, 128>}, {transform_indices = @transform_1, window_bounds = array<i64: 128, 128>}, {transform_indices = @transform_2, window_bounds = array<i64: 1, 128>}, {transform_indices = @transform_3, window_bounds = array<i64: 8, 128>}]} {
    %c0_i32 = arith.constant 0 : i32
    %0 = arith.cmpi eq, %arg1, %c0_i32 : i32
    %1 = arith.extui %0 : i1 to i32
    %c0_i32_0 = arith.constant 0 : i32
    %2 = arith.cmpi ne, %1, %c0_i32_0 : i32
    scf.if %2 {
      %c0_9 = arith.constant 0 : index
      %c0_10 = arith.constant 0 : index
      %12 = vector.load %arg2[%c0_9, %c0_10] : memref<8x128xf32, #tpu.memory_space<vmem>>, vector<8x128xf32>
      %13 = arith.mulf %12, %12 : vector<8x128xf32>
      %cst_11 = arith.constant dense<0.000000e+00> : vector<8xf32>
      %14 = vector.multi_reduction <add>, %13, %cst_11 [1] : vector<8x128xf32> to vector<8xf32>
      %15 = vector.shape_cast %14 : vector<8xf32> to vector<8x1xf32>
      %cst_12 = arith.constant 1.000000e-24 : f32
      %16 = vector.broadcast %cst_12 : f32 to vector<8x1xf32>
      %17 = arith.maximumf %15, %16 : vector<8x1xf32>
      %18 = math.rsqrt %17 : vector<8x1xf32>
      %19 = vector.broadcast %18 : vector<8x1xf32> to vector<8x128xf32>
      %20 = arith.mulf %12, %19 : vector<8x128xf32>
      %21 = arith.truncf %20 : vector<8x128xf32> to vector<8x128xbf16>
      %c0_13 = arith.constant 0 : index
      %c0_14 = arith.constant 0 : index
      %22 = vector.load %arg6[%c0_13, %c0_14] : memref<8x128xbf16, #tpu.memory_space<vmem>>, vector<8x128xbf16>
      tpu.vector_store %arg6[%c0_13, %c0_14], %21 {strides = array<i32>} : memref<8x128xbf16, #tpu.memory_space<vmem>>, vector<8x128xbf16>,
    } else {
    }
    %c0 = arith.constant 0 : index
    %c0_1 = arith.constant 0 : index
    %3 = vector.load %arg6[%c0, %c0_1] : memref<8x128xbf16, #tpu.memory_space<vmem>>, vector<8x128xbf16>
    %c0_2 = arith.constant 0 : index
    %c0_3 = arith.constant 0 : index
    %4 = vector.load %arg3[%c0_2, %c0_3] : memref<128x128xbf16, #tpu.memory_space<vmem>>, vector<128x128xbf16>
    %cst = arith.constant dense<0.000000e+00> : vector<8x128xf32>
    %5 = tpu.matmul %3, %4, %cst {dimension_numbers = #tpu.dot_dimension_numbers<[1], [0], [0], [1], [0, 0, 1, 1], [], []>} : vector<8x128xbf16>, vector<128x128xbf16>, vector<8x128xf32> -> vector<8x128xf32>
    %c0_4 = arith.constant 0 : index
    %c0_5 = arith.constant 0 : index
    %6 = vector.load %arg4[%c0_4, %c0_5] : memref<1x128xf32, #tpu.memory_space<vmem>>, vector<1x128xf32>
    %7 = vector.broadcast %6 : vector<1x128xf32> to vector<8x128xf32>
    %8 = arith.mulf %5, %7 : vector<8x128xf32>
    %cst_6 = arith.constant 5.000000e-01 : f32
    %9 = vector.broadcast %cst_6 : f32 to vector<8x128xf32>
    %10 = arith.addf %8, %9 : vector<8x128xf32>
    %c0_7 = arith.constant 0 : index
    %c0_8 = arith.constant 0 : index
    %11 = vector.load %arg5[%c0_7, %c0_8] : memref<8x128xf32, #tpu.memory_space<vmem>>, vector<8x128xf32>
    tpu.vector_store %arg5[%c0_7, %c0_8], %10 {strides = array<i32>} : memref<8x128xf32, #tpu.memory_space<vmem>>, vector<8x128xf32>,
    return
  }
  func.func @transform_0(%arg0: i32, %arg1: i32) -> (i32, i32) {
    %c0_i32 = arith.constant 0 : i32
    %c0_i32_0 = arith.constant 0 : i32
    return %arg0, %c0_i32 : i32, i32
  }
  func.func @transform_1(%arg0: i32, %arg1: i32) -> (i32, i32) {
    %c0_i32 = arith.constant 0 : i32
    %c0_i32_0 = arith.constant 0 : i32
    return %c0_i32, %arg1 : i32, i32
  }
  func.func @transform_2(%arg0: i32, %arg1: i32) -> (i32, i32) {
    %c0_i32 = arith.constant 0 : i32
    %c0_i32_0 = arith.constant 0 : i32
    return %c0_i32, %arg1 : i32, i32
  }
  func.func @transform_3(%arg0: i32, %arg1: i32) -> (i32, i32) {
    %c0_i32 = arith.constant 0 : i32
    return %arg0, %arg1 : i32, i32
  }
}

</mosaic_0001>

<llo_original>
// kernel: tpu_custom_call.1
$region0: #{tpu_custom_call.1}
  #allocation0 [shape = 'u32[]', space=smem, size = 0x4, offset = 0x4, fixed_abs, tag = 'smem constant byte address 0x4 - core index']
  #allocation1 [shape = 'u32[144,128]{1,0:T(1,128)}', space=vmem, size = 0x12000, scoped, tag = 'internal scratch']
  #allocation2 [shape = 'bf16[8,128]{1,0:T(8,128)(2,1)}', space=vmem, size = 0x800, scoped, tag = 'scratch operand']
  %s0 = inlined_call_operand.hbm [shape: f32[8,128], index: 0, kind: input, shape index: {}]
  %s1 = inlined_call_operand.hbm [shape: bf16[128,128], index: 1, kind: input, shape index: {}]
  %s2 = inlined_call_operand.vmem [shape: f32[1,128], index: 2, kind: input, shape index: {}]
  %s3 = inlined_call_operand.hbm [shape: f32[8,128], index: 3, kind: output, shape index: {}]
  %s4 = sld [smem:[#allocation0]]
  $region34: #{tpu_custom_call.1} parent=0
    _
  %s6 = ssub.s32 1, %s4
  %s7 = scalar_select 0, %s6, %s4
  $region1: #{tpu_custom_call.1} parent=0
    #allocation3 [shape = 'u8[4096]{0}', space=vmem, size = 0x1000, scoped, tag = 'input window, operand 0, single buffered']
    #allocation4 [shape = 's32[1]{0}', space=sflag, size = 0x4, scoped, tag = 'scoped memory for tpu_custom_call.1']
    #allocation5 [shape = 's32[1]{0}', space=sflag, size = 0x4, scoped, tag = 'scoped memory for tpu_custom_call.1']
    #allocation6 [shape = 'u8[32768]{0}', space=vmem, size = 0x8000, scoped, tag = 'input window, operand 1, single buffered']
    #allocation7 [shape = 's32[1]{0}', space=sflag, size = 0x4, scoped, tag = 'scoped memory for tpu_custom_call.1']
    #allocation8 [shape = 'u8[4096]{0}', space=vmem, size = 0x1000, scoped, tag = 'output window, operand 0, single buffered']
    %8 = vsyncpa [#allocation4], 0
    %9 = vsyncpa [#allocation7], 0
    %10 = vsyncpa [#allocation5], 0
    // Predicated region
    $region2: #{tpu_custom_call.1} parent=1 // pred_check
      _
    $region3: #{tpu_custom_call.1} parent=1 // pred_check_branch
      %12 = sbr.rel (0) target = $region5
    $region4: #{tpu_custom_call.1} parent=1 // pred_region
      %s14 = ssub.s32 128, 128
      %15 = vsyncadd [#allocation4], %s14
      %s17 = sshll.u32 [#allocation3], 4
      %s18 = int_to_ptr.vmem [resolvable:$true] %s17
      %20 = dma.hbm_to_vmem [thread:$0]  %s0, 128, %s18, [#allocation4]
    $region5: #{tpu_custom_call.1} parent=1 // pred_fallthru
      _
    // Predicated region
    $region6: #{tpu_custom_call.1} parent=1 // pred_check
      _
    $region7: #{tpu_custom_call.1} parent=1 // pred_check_branch
      %22 = sbr.rel (0) target = $region9
    $region8: #{tpu_custom_call.1} parent=1 // pred_region
      %s24 = ssub.s32 1024, 1024
      %25 = vsyncadd [#allocation7], %s24
      %s26 = sshll.u32 [#allocation6], 4
      %s27 = int_to_ptr.vmem [resolvable:$true] %s26
      %32 = dma.hbm_to_vmem [thread:$0]  %s1, 1024, %s27, [#allocation7], 64, 64, 4
    $region9: #{tpu_custom_call.1} parent=1 // pred_fallthru
      _
    // Predicated region
    $region10: #{tpu_custom_call.1} parent=1 // pred_check
      _
    $region11: #{tpu_custom_call.1} parent=1 // pred_check_branch
      %34 = sbr.rel (0) target = $region13
    $region12: #{tpu_custom_call.1} parent=1 // pred_region
      _
    $region13: #{tpu_custom_call.1} parent=1 // pred_fallthru
      _
    // Predicated region
    $region14: #{tpu_custom_call.1} parent=1 // pred_check
      _
    $region15: #{tpu_custom_call.1} parent=1 // pred_check_branch
      %36 = sbr.rel (0) target = $region17
    $region16: #{tpu_custom_call.1} parent=1 // pred_region
      %37 = dma.done [#allocation4], 128
    $region17: #{tpu_custom_call.1} parent=1 // pred_fallthru
      _
    // Predicated region
    $region18: #{tpu_custom_call.1} parent=1 // pred_check
      _
    $region19: #{tpu_custom_call.1} parent=1 // pred_check_branch
      %39 = sbr.rel (0) target = $region21
    $region20: #{tpu_custom_call.1} parent=1 // pred_region
      %40 = dma.done [#allocation7], 1024
    $region21: #{tpu_custom_call.1} parent=1 // pred_fallthru
      _
    %p42 = scmp.eq.s32.totalorder 0, 0
    // Predicated region
    $region22: #{tpu_custom_call.1} parent=1 // pred_check
      %p43 = pneg %p42
    $region23: #{tpu_custom_call.1} parent=1 // pred_check_branch
      %45 = sbr.rel (%p43) target = $region25
    $region24: #{tpu_custom_call.1} parent=1 // pred_region
      %v46 = vld [vmem:[#allocation3] sm:$0xff]
      %v47 = vmul.f32 %v46, %v46
      %48 = vadd.xlane.f32.xlu0 %v47
      %v49 = vpop.xlane.xlu0 %48
      %v50 = vmax.f32 %v49, 1e-24
      %v51 = vrsqrt.pop %v50
      %v52 = vmul.f32 %v46, %v51
      %v53 = vpack.c.bf16 %v52, %v52
      %54 = vst [vmem:[#allocation2] sm:$0xf] %v53
    $region25: #{tpu_custom_call.1} parent=1 // pred_fallthru
      _
    %v55 = vld [vmem:[#allocation2] sm:$0xf]
    %v56 = vld [vmem:[#allocation6] sm:$0xf]
    %v57 = vld [vmem:[#allocation6 + $0x4] sm:$0xf]
    %v58 = vld [vmem:[#allocation6 + $0x8] sm:$0xf]
    %v59 = vld [vmem:[#allocation6 + $0xc] sm:$0xf]
    %v60 = vld [vmem:[#allocation6 + $0x10] sm:$0xf]
    %v61 = vld [vmem:[#allocation6 + $0x14] sm:$0xf]
    %v62 = vld [vmem:[#allocation6 + $0x18] sm:$0xf]
    %v63 = vld [vmem:[#allocation6 + $0x1c] sm:$0xf]
    %v64 = vld [vmem:[#allocation6 + $0x20] sm:$0xf]
    %v65 = vld [vmem:[#allocation6 + $0x24] sm:$0xf]
    %v66 = vld [vmem:[#allocation6 + $0x28] sm:$0xf]
    %v67 = vld [vmem:[#allocation6 + $0x2c] sm:$0xf]
    %v68 = vld [vmem:[#allocation6 + $0x30] sm:$0xf]
    %v69 = vld [vmem:[#allocation6 + $0x34] sm:$0xf]
    %v70 = vld [vmem:[#allocation6 + $0x38] sm:$0xf]
    %v71 = vld [vmem:[#allocation6 + $0x3c] sm:$0xf]
    %v88 = vunpack.c.l.b16 %v56
    %v89 = vunpack.c.l.b16 %v57
    %v90 = vunpack.c.l.b16 %v58
    %v91 = vunpack.c.l.b16 %v59
    %v92 = vunpack.c.l.b16 %v60
    %v93 = vunpack.c.l.b16 %v61
    %v94 = vunpack.c.l.b16 %v62
    %v95 = vunpack.c.l.b16 %v63
    %v96 = vunpack.c.l.b16 %v64
    %v97 = vunpack.c.l.b16 %v65
    %v98 = vunpack.c.l.b16 %v66
    %v99 = vunpack.c.l.b16 %v67
    %v100 = vunpack.c.l.b16 %v68
    %v101 = vunpack.c.l.b16 %v69
    %v102 = vunpack.c.l.b16 %v70
    %v103 = vunpack.c.l.b16 %v71
    %v104 = vpack.c.b16 %v89, %v88
    %v105 = vpack.c.b16 %v91, %v90
    %v106 = vpack.c.b16 %v93, %v92
    %v107 = vpack.c.b16 %v95, %v94
    %v108 = vpack.c.b16 %v97, %v96
    %v109 = vpack.c.b16 %v99, %v98
    %v110 = vpack.c.b16 %v101, %v100
    %v111 = vpack.c.b16 %v103, %v102
    %120 = vmatprep.subr.bf16.mxu0 0
    %121 = vmatpush1.bf16.msra.mxu0 %v104
    %122 = vmatprep.subr.bf16.mxu0 0
    %123 = vmatpush1.bf16.msra.mxu0 %v105
    %124 = vmatprep.subr.bf16.mxu0 0
    %125 = vmatpush1.bf16.msra.mxu0 %v106
    %126 = vmatprep.subr.bf16.mxu0 0
    %127 = vmatpush1.bf16.msra.mxu0 %v107
    %128 = vmatprep.subr.bf16.mxu0 0
    %129 = vmatpush1.bf16.msra.mxu0 %v108
    %130 = vmatprep.subr.bf16.mxu0 0
    %131 = vmatpush1.bf16.msra.mxu0 %v109
    %132 = vmatprep.subr.bf16.mxu0 0
    %133 = vmatpush1.bf16.msra.mxu0 %v110
    %134 = vmatprep.subr.bf16.mxu0 0
    %135 = vmatpush1.bf16.msra.mxu0 %v111
    %136 = vmatprep.subr.bf16.mxu0 0
    %137 = vmatpush1.bf16.msra.mxu0 0
    %138 = vmatprep.subr.bf16.mxu0 0
    %139 = vmatpush1.bf16.msra.mxu0 0
    %140 = vmatprep.subr.bf16.mxu0 0
    %141 = vmatpush1.bf16.msra.mxu0 0
    %142 = vmatprep.subr.bf16.mxu0 0
    %143 = vmatpush1.bf16.msra.mxu0 0
    %144 = vmatprep.subr.bf16.mxu0 0
    %145 = vmatpush1.bf16.msra.mxu0 0
    %146 = vmatprep.subr.bf16.mxu0 0
    %147 = vmatpush1.bf16.msra.mxu0 0
    %148 = vmatprep.subr.bf16.mxu0 0
    %149 = vmatpush1.bf16.msra.mxu0 0
    %150 = vmatprep.subr.bf16.mxu0 0
    %151 = vmatpush1.bf16.msra.mxu0 0
    %152 = vmatprep.mubr.bf16.mxu0 0
    %153 = vmatmul.mubr.bf16.gmra.mrb[0].mxu0 %v55
    %v154 = vpop.f32.mrb[0].mxu0
    %v155 = vadd.f32 0.0, %v154
    %v156 = vpop.f32.mrb[0].mxu0
    %v157 = vpop.f32.mrb[0].mxu0
    %v158 = vpop.f32.mrb[0].mxu0
    %159 = vdwg.mxu0
    %v160 = vld [vmem:[%s2] sm:$0x1]
    %v162 = vlaneseq
    %v163 = vshrl.u32 %v162, 7
    %v164 = vsub.s32 0, %v163
    %v165 = vrot.slane %v160, %v164
    %v167 = vmul.f32 %v155, %v165
    %v168 = vadd.f32 %v167, 0.5
    %169 = vst [vmem:[#allocation8] sm:$0xff] %v168
    // Predicated region
    $region26: #{tpu_custom_call.1} parent=1 // pred_check
      _
    $region27: #{tpu_custom_call.1} parent=1 // pred_check_branch
      %171 = sbr.rel (0) target = $region29
    $region28: #{tpu_custom_call.1} parent=1 // pred_region
      %s173 = ssub.s32 128, 128
      %174 = vsyncadd [#allocation5], %s173
      %s176 = sshll.u32 [#allocation8], 4
      %s177 = int_to_ptr.vmem [resolvable:$true] %s176
      %179 = dma.vmem_to_hbm [thread:$0]  %s177, 128, %s3, [#allocation5]
    $region29: #{tpu_custom_call.1} parent=1 // pred_fallthru
      _
    // Predicated region
    $region30: #{tpu_custom_call.1} parent=1 // pred_check
      _
    $region31: #{tpu_custom_call.1} parent=1 // pred_check_branch
      %181 = sbr.rel (0) target = $region33
    $region32: #{tpu_custom_call.1} parent=1 // pred_region
      %182 = dma.done [#allocation5], 128
    $region33: #{tpu_custom_call.1} parent=1 // pred_fallthru
      _
    %183 = vsyncpa [#allocation4], 1
    %184 = vsyncpa [#allocation7], 1
    %185 = vsyncpa [#allocation5], 1

</llo_original>
